<compile_context>
chip_gen: v7x
topology: tpu7x:2x2x1
jax: 0.10.0
libtpu: 0.0.40
codegen_flags: <defaults>
</compile_context>

<pallas_src>
import functools

import jax
import jax.numpy as jnp
from jax.experimental import pallas as pl
from jax.experimental.pallas import tpu as pltpu


def _net_kernel(x_ref, w1_ref, b1_ref, w2_ref, b2_ref, wh_ref, bh_ref,
                out_ref, *, n_out):
    x = x_ref[...]

    # fc1 + relu
    h1 = jnp.dot(x, w1_ref[...], preferred_element_type=jnp.float32) + b1_ref[...]
    h1 = jnp.maximum(h1, 0.0)

    # fc2 + relu
    h2 = jnp.dot(h1, w2_ref[...], preferred_element_type=jnp.float32) + b2_ref[...]
    h2 = jnp.maximum(h2, 0.0)

    # fused heads: one (n_mid, n_out + 1) matmul -> split adv / val
    head = jnp.dot(h2, wh_ref[...], preferred_element_type=jnp.float32) + bh_ref[...]
    adv = head[:, :n_out]                 # (tb, n_out)
    val = head[:, n_out:n_out + 1]        # (tb, 1), broadcasts like torch .expand

    # dueling combine: val + adv - mean(adv, axis=1, keepdims=True)
    adv_mean = jnp.mean(adv, axis=1, keepdims=True)
    out_ref[...] = (val + adv - adv_mean).astype(out_ref.dtype)


def net_forward(x, params, *, batch_tile=256):
    """x: (B, n_in) float32. params: dict of weights in (in, out) layout."""
    w1, b1 = params["w1"], params["b1"]
    w2, b2 = params["w2"], params["b2"]
    wadv, badv = params["w_adv"], params["b_adv"]
    wv, bv = params["w_v"], params["b_v"]

    B, n_in = x.shape
    n_out = wadv.shape[1]

    # Fuse the two heads into a single lane-contiguous weight / bias (opt 1).
    w_head = jnp.concatenate([wadv, wv], axis=1)   # (n_mid, n_out + 1)
    b_head = jnp.concatenate([badv, bv], axis=1)   # (1, n_out + 1)

    # Batch tiling: one grid step for small B, otherwise 256-row tiles (opt 3).
    if B <= batch_tile:
        tb = B
        b_pad = B
    else:
        tb = batch_tile
        b_pad = ((B + tb - 1) // tb) * tb

    x_p = x if b_pad == B else jnp.pad(x, ((0, b_pad - B), (0, 0)))

    const2d = lambda shape: pl.BlockSpec(shape, lambda i: (0, 0))

    out = pl.pallas_call(
        functools.partial(_net_kernel, n_out=n_out),
        out_shape=jax.ShapeDtypeStruct((b_pad, n_out), jnp.float32),
        grid=(b_pad // tb,),
        in_specs=[
            pl.BlockSpec((tb, n_in), lambda i: (i, 0)),   # x: tiled over batch
            const2d(w1.shape), const2d(b1.shape),         # weights: VMEM-resident
            const2d(w2.shape), const2d(b2.shape),
            const2d(w_head.shape), const2d(b_head.shape),
        ],
        out_specs=pl.BlockSpec((tb, n_out), lambda i: (i, 0)),
        compiler_params=pltpu.CompilerParams(
            dimension_semantics=("parallel",)),
    )(x_p, w1, b1, w2, b2, w_head, b_head)

    return out if b_pad == B else out[:B]


def init_params(key, n_in, n_mid, n_out):
    """Deterministic synthetic parameters (uniform, like nn.Linear default)."""
    ks = jax.random.split(key, 8)

    def lin(kw, kb, fan_in, fan_out):
        bound = 1.0 / jnp.sqrt(fan_in)
        # stored as (in, out) == transpose of PyTorch's (out, in)
        w = jax.random.uniform(kw, (fan_in, fan_out), jnp.float32, -bound, bound)
        b = jax.random.uniform(kb, (1, fan_out), jnp.float32, -bound, bound)
        return w, b

    w1, b1 = lin(ks[0], ks[1], n_in, n_mid)
    w2, b2 = lin(ks[2], ks[3], n_mid, n_mid)
    w_adv, b_adv = lin(ks[4], ks[5], n_mid, n_out)
    w_v, b_v = lin(ks[6], ks[7], n_mid, 1)
    return dict(w1=w1, b1=b1, w2=w2, b2=b2,
                w_adv=w_adv, b_adv=b_adv, w_v=w_v, b_v=b_v)


def _reference(x, p):
    h1 = jnp.maximum(x @ p["w1"] + p["b1"], 0.0)
    h2 = jnp.maximum(h1 @ p["w2"] + p["b2"], 0.0)
    adv = h2 @ p["w_adv"] + p["b_adv"]
    val = h2 @ p["w_v"] + p["b_v"]
    return val + adv - jnp.mean(adv, axis=1, keepdims=True)


if __name__ == "__main__":
    # Small shapes implied by the module: batch of states, n_in features,
    # hidden width n_mid, n_out actions.
    n_in, n_mid, n_out = 32, 32, 8

    key = jax.random.PRNGKey(0)
    k_x, k_p, k_xl = jax.random.split(key, 3)
    params = init_params(k_p, n_in, n_mid, n_out)

    # 1) Small per-step inference batch (single grid step).
    B_small = 8
    x_small = jax.random.normal(k_x, (B_small, n_in), jnp.float32)
    out_small = jax.block_until_ready(net_forward(x_small, params))
    ref_small = _reference(x_small, params)
    assert out_small.shape == (B_small, n_out)
    assert jnp.allclose(out_small, ref_small, atol=1e-5, rtol=1e-5), \
        "small-batch mismatch vs reference"

    # 2) Replay-buffer-sized batch exercising the tiled (parallel) grid path.
    B_big = 512
    x_big = jax.random.normal(k_xl, (B_big, n_in), jnp.float32)
    out_big = jax.block_until_ready(net_forward(x_big, params, batch_tile=256))
    ref_big = _reference(x_big, params)
    assert out_big.shape == (B_big, n_out)
    assert jnp.allclose(out_big, ref_big, atol=1e-5, rtol=1e-5), \
        "tiled-batch mismatch vs reference"

    print("KERNEL_OK")
</pallas_src>

<mosaic_0001>
module attributes {stable_mosaic.version = 11 : i64} {
  func.func @_net_kernel(%arg0: i32, %arg1: memref<8x32xf32, #tpu.memory_space<vmem>>, %arg2: memref<32x32xf32, #tpu.memory_space<vmem>>, %arg3: memref<1x32xf32, #tpu.memory_space<vmem>>, %arg4: memref<32x32xf32, #tpu.memory_space<vmem>>, %arg5: memref<1x32xf32, #tpu.memory_space<vmem>>, %arg6: memref<32x9xf32, #tpu.memory_space<vmem>>, %arg7: memref<1x9xf32, #tpu.memory_space<vmem>>, %arg8: memref<8x8xf32, #tpu.memory_space<vmem>>) attributes {dimension_semantics = [#tpu.dimension_semantics<parallel>], iteration_bounds = array<i64: 1>, scalar_prefetch = 0 : i64, scratch_operands = 0 : i64, tpu.core_type = #tpu.core_type<tc>, window_params = [{transform_indices = @transform_0, window_bounds = array<i64: 8, 32>}, {pipeline_mode = #tpu.pipeline_mode<synchronous>, transform_indices = @transform_1, window_bounds = array<i64: 32, 32>}, {pipeline_mode = #tpu.pipeline_mode<synchronous>, transform_indices = @transform_2, window_bounds = array<i64: 1, 32>}, {pipeline_mode = #tpu.pipeline_mode<synchronous>, transform_indices = @transform_3, window_bounds = array<i64: 32, 32>}, {pipeline_mode = #tpu.pipeline_mode<synchronous>, transform_indices = @transform_4, window_bounds = array<i64: 1, 32>}, {pipeline_mode = #tpu.pipeline_mode<synchronous>, transform_indices = @transform_5, window_bounds = array<i64: 32, 9>}, {pipeline_mode = #tpu.pipeline_mode<synchronous>, transform_indices = @transform_6, window_bounds = array<i64: 1, 9>}, {transform_indices = @transform_7, window_bounds = array<i64: 8, 8>}]} {
    %c0 = arith.constant 0 : index
    %c0_0 = arith.constant 0 : index
    %0 = vector.load %arg1[%c0, %c0_0] : memref<8x32xf32, #tpu.memory_space<vmem>>, vector<8x32xf32>
    %c0_1 = arith.constant 0 : index
    %c0_2 = arith.constant 0 : index
    %1 = vector.load %arg2[%c0_1, %c0_2] : memref<32x32xf32, #tpu.memory_space<vmem>>, vector<32x32xf32>
    %cst = arith.constant dense<0.000000e+00> : vector<8x32xf32>
    %2 = tpu.matmul %0, %1, %cst {dimension_numbers = #tpu.dot_dimension_numbers<[1], [0], [0], [1], [0, 0, 1, 1], [], []>} : vector<8x32xf32>, vector<32x32xf32>, vector<8x32xf32> -> vector<8x32xf32>
    %c0_3 = arith.constant 0 : index
    %c0_4 = arith.constant 0 : index
    %3 = vector.load %arg3[%c0_3, %c0_4] : memref<1x32xf32, #tpu.memory_space<vmem>>, vector<1x32xf32>
    %4 = vector.broadcast %3 : vector<1x32xf32> to vector<8x32xf32>
    %5 = arith.addf %2, %4 : vector<8x32xf32>
    %cst_5 = arith.constant 0.000000e+00 : f32
    %6 = vector.broadcast %cst_5 : f32 to vector<8x32xf32>
    %7 = arith.maximumf %5, %6 : vector<8x32xf32>
    %c0_6 = arith.constant 0 : index
    %c0_7 = arith.constant 0 : index
    %8 = vector.load %arg4[%c0_6, %c0_7] : memref<32x32xf32, #tpu.memory_space<vmem>>, vector<32x32xf32>
    %cst_8 = arith.constant dense<0.000000e+00> : vector<8x32xf32>
    %9 = tpu.matmul %7, %8, %cst_8 {dimension_numbers = #tpu.dot_dimension_numbers<[1], [0], [0], [1], [0, 0, 1, 1], [], []>} : vector<8x32xf32>, vector<32x32xf32>, vector<8x32xf32> -> vector<8x32xf32>
    %c0_9 = arith.constant 0 : index
    %c0_10 = arith.constant 0 : index
    %10 = vector.load %arg5[%c0_9, %c0_10] : memref<1x32xf32, #tpu.memory_space<vmem>>, vector<1x32xf32>
    %11 = vector.broadcast %10 : vector<1x32xf32> to vector<8x32xf32>
    %12 = arith.addf %9, %11 : vector<8x32xf32>
    %cst_11 = arith.constant 0.000000e+00 : f32
    %13 = vector.broadcast %cst_11 : f32 to vector<8x32xf32>
    %14 = arith.maximumf %12, %13 : vector<8x32xf32>
    %c0_12 = arith.constant 0 : index
    %c0_13 = arith.constant 0 : index
    %15 = vector.load %arg6[%c0_12, %c0_13] : memref<32x9xf32, #tpu.memory_space<vmem>>, vector<32x9xf32>
    %cst_14 = arith.constant dense<0.000000e+00> : vector<8x9xf32>
    %16 = tpu.matmul %14, %15, %cst_14 {dimension_numbers = #tpu.dot_dimension_numbers<[1], [0], [0], [1], [0, 0, 1, 1], [], []>} : vector<8x32xf32>, vector<32x9xf32>, vector<8x9xf32> -> vector<8x9xf32>
    %c0_15 = arith.constant 0 : index
    %c0_16 = arith.constant 0 : index
    %17 = vector.load %arg7[%c0_15, %c0_16] : memref<1x9xf32, #tpu.memory_space<vmem>>, vector<1x9xf32>
    %18 = vector.broadcast %17 : vector<1x9xf32> to vector<8x9xf32>
    %19 = arith.addf %16, %18 : vector<8x9xf32>
    %20 = vector.extract_strided_slice %19 {offsets = [0, 0], sizes = [8, 8], strides = [1, 1]} : vector<8x9xf32> to vector<8x8xf32>
    %21 = vector.extract_strided_slice %19 {offsets = [0, 8], sizes = [8, 1], strides = [1, 1]} : vector<8x9xf32> to vector<8x1xf32>
    %cst_17 = arith.constant dense<0.000000e+00> : vector<8xf32>
    %22 = vector.multi_reduction <add>, %20, %cst_17 [1] : vector<8x8xf32> to vector<8xf32>
    %23 = vector.shape_cast %22 : vector<8xf32> to vector<8x1xf32>
    %cst_18 = arith.constant 8.000000e+00 : f32
    %24 = vector.broadcast %cst_18 : f32 to vector<8x1xf32>
    %25 = arith.divf %23, %24 : vector<8x1xf32>
    %26 = vector.broadcast %21 : vector<8x1xf32> to vector<8x8xf32>
    %27 = arith.addf %26, %20 : vector<8x8xf32>
    %28 = vector.broadcast %25 : vector<8x1xf32> to vector<8x8xf32>
    %29 = arith.subf %27, %28 : vector<8x8xf32>
    %c0_19 = arith.constant 0 : index
    %c0_20 = arith.constant 0 : index
    %30 = vector.load %arg8[%c0_19, %c0_20] : memref<8x8xf32, #tpu.memory_space<vmem>>, vector<8x8xf32>
    tpu.vector_store %arg8[%c0_19, %c0_20], %29 {strides = array<i32>} : memref<8x8xf32, #tpu.memory_space<vmem>>, vector<8x8xf32>,
    return
  }
  func.func @transform_0(%arg0: i32) -> (i32, i32) {
    %c0_i32 = arith.constant 0 : i32
    %c0_i32_0 = arith.constant 0 : i32
    return %arg0, %c0_i32 : i32, i32
  }
  func.func @transform_1(%arg0: i32) -> (i32, i32) {
    %c0_i32 = arith.constant 0 : i32
    %c0_i32_0 = arith.constant 0 : i32
    %c0_i32_1 = arith.constant 0 : i32
    return %c0_i32, %c0_i32_0 : i32, i32
  }
  func.func @transform_2(%arg0: i32) -> (i32, i32) {
    %c0_i32 = arith.constant 0 : i32
    %c0_i32_0 = arith.constant 0 : i32
    %c0_i32_1 = arith.constant 0 : i32
    return %c0_i32, %c0_i32_0 : i32, i32
  }
  func.func @transform_3(%arg0: i32) -> (i32, i32) {
    %c0_i32 = arith.constant 0 : i32
    %c0_i32_0 = arith.constant 0 : i32
    %c0_i32_1 = arith.constant 0 : i32
    return %c0_i32, %c0_i32_0 : i32, i32
  }
  func.func @transform_4(%arg0: i32) -> (i32, i32) {
    %c0_i32 = arith.constant 0 : i32
    %c0_i32_0 = arith.constant 0 : i32
    %c0_i32_1 = arith.constant 0 : i32
    return %c0_i32, %c0_i32_0 : i32, i32
  }
  func.func @transform_5(%arg0: i32) -> (i32, i32) {
    %c0_i32 = arith.constant 0 : i32
    %c0_i32_0 = arith.constant 0 : i32
    %c0_i32_1 = arith.constant 0 : i32
    return %c0_i32, %c0_i32_0 : i32, i32
  }
  func.func @transform_6(%arg0: i32) -> (i32, i32) {
    %c0_i32 = arith.constant 0 : i32
    %c0_i32_0 = arith.constant 0 : i32
    %c0_i32_1 = arith.constant 0 : i32
    return %c0_i32, %c0_i32_0 : i32, i32
  }
  func.func @transform_7(%arg0: i32) -> (i32, i32) {
    %c0_i32 = arith.constant 0 : i32
    %c0_i32_0 = arith.constant 0 : i32
    return %arg0, %c0_i32 : i32, i32
  }
}

</mosaic_0001>

<llo_original>
// kernel: tpu_custom_call.1
$region0: #{tpu_custom_call.1}
  #allocation0 [shape = 'u32[]', space=smem, size = 0x4, offset = 0x4, fixed_abs, tag = 'smem constant byte address 0x4 - core index']
  #allocation1 [shape = 'u32[144,128]{1,0:T(1,128)}', space=vmem, size = 0x12000, scoped, tag = 'internal scratch']
  %s0 = inlined_call_operand.vmem [shape: f32[8,32], index: 0, kind: input, shape index: {}]
  %s1 = inlined_call_operand.vmem [shape: f32[32,32], index: 1, kind: input, shape index: {}]
  %s2 = inlined_call_operand.vmem [shape: f32[1,32], index: 2, kind: input, shape index: {}]
  %s3 = inlined_call_operand.hbm [shape: f32[32,32], index: 3, kind: input, shape index: {}]
  %s4 = inlined_call_operand.vmem [shape: f32[1,32], index: 4, kind: input, shape index: {}]
  %s5 = inlined_call_operand.vmem [shape: f32[32,9], index: 5, kind: input, shape index: {}]
  %s6 = inlined_call_operand.vmem [shape: f32[1,9], index: 6, kind: input, shape index: {}]
  %s7 = inlined_call_operand.hbm [shape: f32[8,8], index: 7, kind: output, shape index: {}]
  %s8 = sld [smem:[#allocation0]]
  $region42: #{tpu_custom_call.1} parent=0
    _
  %s10 = ssub.s32 1, %s8
  %s11 = scalar_select 0, %s10, %s8
  $region1: #{tpu_custom_call.1} parent=0
    #allocation2 [shape = 'u8[16384]{0}', space=vmem, size = 0x4000, scoped, tag = 'input window, operand 3, single buffered']
    #allocation3 [shape = 's32[1]{0}', space=sflag, size = 0x4, scoped, tag = 'scoped memory for tpu_custom_call.1']
    #allocation4 [shape = 's32[1]{0}', space=sflag, size = 0x4, scoped, tag = 'scoped memory for tpu_custom_call.1']
    #allocation5 [shape = 'u8[4096]{0}', space=vmem, size = 0x1000, scoped, tag = 'output window, operand 0, single buffered']
    %12 = vsyncpa [#allocation3], 0
    %13 = vsyncpa [#allocation4], 0
    // Predicated region
    $region2: #{tpu_custom_call.1} parent=1 // pred_check
      _
    $region3: #{tpu_custom_call.1} parent=1 // pred_check_branch
      %15 = sbr.rel (0) target = $region5
    $region4: #{tpu_custom_call.1} parent=1 // pred_region
      _
    $region5: #{tpu_custom_call.1} parent=1 // pred_fallthru
      _
    // Predicated region
    $region6: #{tpu_custom_call.1} parent=1 // pred_check
      _
    $region7: #{tpu_custom_call.1} parent=1 // pred_check_branch
      %17 = sbr.rel (0) target = $region9
    $region8: #{tpu_custom_call.1} parent=1 // pred_region
      _
    $region9: #{tpu_custom_call.1} parent=1 // pred_fallthru
      _
    // Predicated region
    $region10: #{tpu_custom_call.1} parent=1 // pred_check
      _
    $region11: #{tpu_custom_call.1} parent=1 // pred_check_branch
      %19 = sbr.rel (0) target = $region13
    $region12: #{tpu_custom_call.1} parent=1 // pred_region
      _
    $region13: #{tpu_custom_call.1} parent=1 // pred_fallthru
      _
    // Predicated region
    $region14: #{tpu_custom_call.1} parent=1 // pred_check
      _
    $region15: #{tpu_custom_call.1} parent=1 // pred_check_branch
      %21 = sbr.rel (0) target = $region17
    $region16: #{tpu_custom_call.1} parent=1 // pred_region
      %s23 = ssub.s32 512, 512
      %24 = vsyncadd [#allocation3], %s23
      %s25 = sshll.u32 [#allocation2], 4
      %s26 = int_to_ptr.vmem [resolvable:$true] %s25
      %31 = dma.hbm_to_vmem [thread:$0]  %s3, 512, %s26, [#allocation3], 128, 128, 8
    $region17: #{tpu_custom_call.1} parent=1 // pred_fallthru
      _
    // Predicated region
    $region18: #{tpu_custom_call.1} parent=1 // pred_check
      _
    $region19: #{tpu_custom_call.1} parent=1 // pred_check_branch
      %33 = sbr.rel (0) target = $region21
    $region20: #{tpu_custom_call.1} parent=1 // pred_region
      _
    $region21: #{tpu_custom_call.1} parent=1 // pred_fallthru
      _
    // Predicated region
    $region22: #{tpu_custom_call.1} parent=1 // pred_check
      _
    $region23: #{tpu_custom_call.1} parent=1 // pred_check_branch
      %35 = sbr.rel (0) target = $region25
    $region24: #{tpu_custom_call.1} parent=1 // pred_region
      _
    $region25: #{tpu_custom_call.1} parent=1 // pred_fallthru
      _
    // Predicated region
    $region26: #{tpu_custom_call.1} parent=1 // pred_check
      _
    $region27: #{tpu_custom_call.1} parent=1 // pred_check_branch
      %37 = sbr.rel (0) target = $region29
    $region28: #{tpu_custom_call.1} parent=1 // pred_region
      _
    $region29: #{tpu_custom_call.1} parent=1 // pred_fallthru
      _
    // Predicated region
    $region30: #{tpu_custom_call.1} parent=1 // pred_check
      _
    $region31: #{tpu_custom_call.1} parent=1 // pred_check_branch
      %39 = sbr.rel (0) target = $region33
    $region32: #{tpu_custom_call.1} parent=1 // pred_region
      %40 = dma.done [#allocation3], 512
    $region33: #{tpu_custom_call.1} parent=1 // pred_fallthru
      _
    %v41 = vld [vmem:[%s0] sm:$0xff]
    %v42 = vld [vmem:[%s1] sm:$0xff]
    %v43 = vld [vmem:[%s1 + $0x8] sm:$0xff]
    %v44 = vld [vmem:[%s1 + $0x10] sm:$0xff]
    %v45 = vld [vmem:[%s1 + $0x18] sm:$0xff]
    %v46 = vld [vmem:[%s2] sm:$0x1]
    %v48 = vlaneseq
    %v49 = vshrl.u32 %v48, 7
    %v50 = vsub.s32 0, %v49
    %v51 = vrot.slane %v46, %v50
    %vm53 = vcmask 261120
    %v55 = vsel %vm53, %v41, 0
    %57 = vmatprep.subr.mxu0 0.0
    %58 = vmatpush1.msra.mxu0 %v42
    %59 = vmatprep.subr.mxu0 0.0
    %60 = vmatpush1.msra.mxu0 %v43
    %61 = vmatprep.subr.mxu0 0.0
    %62 = vmatpush1.msra.mxu0 %v44
    %63 = vmatprep.subr.mxu0 0.0
    %64 = vmatpush1.msra.mxu0 %v45
    %65 = vmatprep.subr.mxu0 0.0
    %66 = vmatpush1.msra.mxu0 0.0
    %67 = vmatprep.subr.mxu0 0.0
    %68 = vmatpush1.msra.mxu0 0.0
    %69 = vmatprep.subr.mxu0 0.0
    %70 = vmatpush1.msra.mxu0 0.0
    %71 = vmatprep.subr.mxu0 0.0
    %72 = vmatpush1.msra.mxu0 0.0
    %73 = vmatprep.subr.mxu0 0.0
    %74 = vmatpush1.msra.mxu0 0.0
    %75 = vmatprep.subr.mxu0 0.0
    %76 = vmatpush1.msra.mxu0 0.0
    %77 = vmatprep.subr.mxu0 0.0
    %78 = vmatpush1.msra.mxu0 0.0
    %79 = vmatprep.subr.mxu0 0.0
    %80 = vmatpush1.msra.mxu0 0.0
    %81 = vmatprep.subr.mxu0 0.0
    %82 = vmatpush1.msra.mxu0 0.0
    %83 = vmatprep.subr.mxu0 0.0
    %84 = vmatpush1.msra.mxu0 0.0
    %85 = vmatprep.subr.mxu0 0.0
    %86 = vmatpush1.msra.mxu0 0.0
    %87 = vmatprep.subr.mxu0 0.0
    %88 = vmatpush1.msra.mxu0 0.0
    %89 = vmatprep.subr.mxu0 0.0
    %90 = vmatpush1.msra.mxu0 0.0
    %91 = vmatprep.subr.mxu0 0.0
    %92 = vmatpush1.msra.mxu0 0.0
    %93 = vmatprep.subr.mxu0 0.0
    %94 = vmatpush1.msra.mxu0 0.0
    %95 = vmatprep.subr.mxu0 0.0
    %96 = vmatpush1.msra.mxu0 0.0
    %97 = vmatprep.subr.mxu0 0.0
    %98 = vmatpush1.msra.mxu0 0.0
    %99 = vmatprep.subr.mxu0 0.0
    %100 = vmatpush1.msra.mxu0 0.0
    %101 = vmatprep.subr.mxu0 0.0
    %102 = vmatpush1.msra.mxu0 0.0
    %103 = vmatprep.subr.mxu0 0.0
    %104 = vmatpush1.msra.mxu0 0.0
    %105 = vmatprep.subr.mxu0 0.0
    %106 = vmatpush1.msra.mxu0 0.0
    %107 = vmatprep.subr.mxu0 0.0
    %108 = vmatpush1.msra.mxu0 0.0
    %109 = vmatprep.subr.mxu0 0.0
    %110 = vmatpush1.msra.mxu0 0.0
    %111 = vmatprep.subr.mxu0 0.0
    %112 = vmatpush1.msra.mxu0 0.0
    %113 = vmatprep.subr.mxu0 0.0
    %114 = vmatpush1.msra.mxu0 0.0
    %115 = vmatprep.subr.mxu0 0.0
    %116 = vmatpush1.msra.mxu0 0.0
    %117 = vmatprep.subr.mxu0 0.0
    %118 = vmatpush1.msra.mxu0 0.0
    %119 = vmatprep.subr.mxu0 0.0
    %120 = vmatpush1.msra.mxu0 0.0
    %121 = vmatprep.mubr.f32.mxu0 0.0
    %122 = vmatmul.mubr.f32.gmra.mrb[0].mxu0 %v55
    %v123 = vpop.f32.mrb[0].mxu0
    %v124 = vadd.f32 %v51, %v123
    %v125 = vpop.f32.mrb[0].mxu0
    %126 = vdwg.mxu0
    %v127 = vmax.f32 %v124, 0.0
    %v128 = vld [vmem:[#allocation2] sm:$0xff]
    %v129 = vld [vmem:[#allocation2 + $0x8] sm:$0xff]
    %v130 = vld [vmem:[#allocation2 + $0x10] sm:$0xff]
    %v131 = vld [vmem:[#allocation2 + $0x18] sm:$0xff]
    %v132 = vld [vmem:[%s4] sm:$0x1]
    %v134 = vlaneseq
    %v135 = vshrl.u32 %v134, 7
    %v136 = vsub.s32 0, %v135
    %v137 = vrot.slane %v132, %v136
    %v140 = vsel %vm53, %v127, 0
    %142 = vmatprep.subr.mxu0 0.0
    %143 = vmatpush1.msra.mxu0 %v128
    %144 = vmatprep.subr.mxu0 0.0
    %145 = vmatpush1.msra.mxu0 %v129
    %146 = vmatprep.subr.mxu0 0.0
    %147 = vmatpush1.msra.mxu0 %v130
    %148 = vmatprep.subr.mxu0 0.0
    %149 = vmatpush1.msra.mxu0 %v131
    %150 = vmatprep.subr.mxu0 0.0
    %151 = vmatpush1.msra.mxu0 0.0
    %152 = vmatprep.subr.mxu0 0.0
    %153 = vmatpush1.msra.mxu0 0.0
    %154 = vmatprep.subr.mxu0 0.0
    %155 = vmatpush1.msra.mxu0 0.0
    %156 = vmatprep.subr.mxu0 0.0
    %157 = vmatpush1.msra.mxu0 0.0
    %158 = vmatprep.subr.mxu0 0.0
    %159 = vmatpush1.msra.mxu0 0.0
    %160 = vmatprep.subr.mxu0 0.0
    %161 = vmatpush1.msra.mxu0 0.0
    %162 = vmatprep.subr.mxu0 0.0
    %163 = vmatpush1.msra.mxu0 0.0
    %164 = vmatprep.subr.mxu0 0.0
    %165 = vmatpush1.msra.mxu0 0.0
    %166 = vmatprep.subr.mxu0 0.0
    %167 = vmatpush1.msra.mxu0 0.0
    %168 = vmatprep.subr.mxu0 0.0
    %169 = vmatpush1.msra.mxu0 0.0
    %170 = vmatprep.subr.mxu0 0.0
    %171 = vmatpush1.msra.mxu0 0.0
    %172 = vmatprep.subr.mxu0 0.0
    %173 = vmatpush1.msra.mxu0 0.0
    %174 = vmatprep.subr.mxu0 0.0
    %175 = vmatpush1.msra.mxu0 0.0
    %176 = vmatprep.subr.mxu0 0.0
    %177 = vmatpush1.msra.mxu0 0.0
    %178 = vmatprep.subr.mxu0 0.0
    %179 = vmatpush1.msra.mxu0 0.0
    %180 = vmatprep.subr.mxu0 0.0
    %181 = vmatpush1.msra.mxu0 0.0
    %182 = vmatprep.subr.mxu0 0.0
    %183 = vmatpush1.msra.mxu0 0.0
    %184 = vmatprep.subr.mxu0 0.0
    %185 = vmatpush1.msra.mxu0 0.0
    %186 = vmatprep.subr.mxu0 0.0
    %187 = vmatpush1.msra.mxu0 0.0
    %188 = vmatprep.subr.mxu0 0.0
    %189 = vmatpush1.msra.mxu0 0.0
    %190 = vmatprep.subr.mxu0 0.0
    %191 = vmatpush1.msra.mxu0 0.0
    %192 = vmatprep.subr.mxu0 0.0
    %193 = vmatpush1.msra.mxu0 0.0
    %194 = vmatprep.subr.mxu0 0.0
    %195 = vmatpush1.msra.mxu0 0.0
    %196 = vmatprep.subr.mxu0 0.0
    %197 = vmatpush1.msra.mxu0 0.0
    %198 = vmatprep.subr.mxu0 0.0
    %199 = vmatpush1.msra.mxu0 0.0
    %200 = vmatprep.subr.mxu0 0.0
    %201 = vmatpush1.msra.mxu0 0.0
    %202 = vmatprep.subr.mxu0 0.0
    %203 = vmatpush1.msra.mxu0 0.0
    %204 = vmatprep.subr.mxu0 0.0
    %205 = vmatpush1.msra.mxu0 0.0
    %206 = vmatprep.mubr.f32.mxu0 0.0
    %207 = vmatmul.mubr.f32.gmra.mrb[0].mxu0 %v140
    %v208 = vpop.f32.mrb[0].mxu0
    %v209 = vadd.f32 %v137, %v208
    %v210 = vpop.f32.mrb[0].mxu0
    %211 = vdwg.mxu0
    %v212 = vmax.f32 %v209, 0.0
    %v213 = vld [vmem:[%s5] sm:$0xff]
    %v214 = vld [vmem:[%s5 + $0x8] sm:$0xff]
    %v215 = vld [vmem:[%s5 + $0x10] sm:$0xff]
    %v216 = vld [vmem:[%s5 + $0x18] sm:$0xff]
    %v217 = vld [vmem:[%s6] sm:$0x1]
    %v219 = vlaneseq
    %v220 = vshrl.u32 %v219, 7
    %v221 = vsub.s32 0, %v220
    %v222 = vrot.slane %v217, %v221
    %v225 = vsel %vm53, %v212, 0
    %227 = vmatprep.subr.mxu0 0.0
    %228 = vmatpush1.msra.mxu0 %v213
    %229 = vmatprep.subr.mxu0 0.0
    %230 = vmatpush1.msra.mxu0 %v214
    %231 = vmatprep.subr.mxu0 0.0
    %232 = vmatpush1.msra.mxu0 %v215
    %233 = vmatprep.subr.mxu0 0.0
    %234 = vmatpush1.msra.mxu0 %v216
    %235 = vmatprep.subr.mxu0 0.0
    %236 = vmatpush1.msra.mxu0 0.0
    %237 = vmatprep.subr.mxu0 0.0
    %238 = vmatpush1.msra.mxu0 0.0
    %239 = vmatprep.subr.mxu0 0.0
    %240 = vmatpush1.msra.mxu0 0.0
    %241 = vmatprep.subr.mxu0 0.0
    %242 = vmatpush1.msra.mxu0 0.0
    %243 = vmatprep.subr.mxu0 0.0
    %244 = vmatpush1.msra.mxu0 0.0
    %245 = vmatprep.subr.mxu0 0.0
    %246 = vmatpush1.msra.mxu0 0.0
    %247 = vmatprep.subr.mxu0 0.0
    %248 = vmatpush1.msra.mxu0 0.0
    %249 = vmatprep.subr.mxu0 0.0
    %250 = vmatpush1.msra.mxu0 0.0
    %251 = vmatprep.subr.mxu0 0.0
    %252 = vmatpush1.msra.mxu0 0.0
    %253 = vmatprep.subr.mxu0 0.0
    %254 = vmatpush1.msra.mxu0 0.0
    %255 = vmatprep.subr.mxu0 0.0
    %256 = vmatpush1.msra.mxu0 0.0
    %257 = vmatprep.subr.mxu0 0.0
    %258 = vmatpush1.msra.mxu0 0.0
    %259 = vmatprep.subr.mxu0 0.0
    %260 = vmatpush1.msra.mxu0 0.0
    %261 = vmatprep.subr.mxu0 0.0
    %262 = vmatpush1.msra.mxu0 0.0
    %263 = vmatprep.subr.mxu0 0.0
    %264 = vmatpush1.msra.mxu0 0.0
    %265 = vmatprep.subr.mxu0 0.0
    %266 = vmatpush1.msra.mxu0 0.0
    %267 = vmatprep.subr.mxu0 0.0
    %268 = vmatpush1.msra.mxu0 0.0
    %269 = vmatprep.subr.mxu0 0.0
    %270 = vmatpush1.msra.mxu0 0.0
    %271 = vmatprep.subr.mxu0 0.0
    %272 = vmatpush1.msra.mxu0 0.0
    %273 = vmatprep.subr.mxu0 0.0
    %274 = vmatpush1.msra.mxu0 0.0
    %275 = vmatprep.subr.mxu0 0.0
    %276 = vmatpush1.msra.mxu0 0.0
    %277 = vmatprep.subr.mxu0 0.0
    %278 = vmatpush1.msra.mxu0 0.0
    %279 = vmatprep.subr.mxu0 0.0
    %280 = vmatpush1.msra.mxu0 0.0
    %281 = vmatprep.subr.mxu0 0.0
    %282 = vmatpush1.msra.mxu0 0.0
    %283 = vmatprep.subr.mxu0 0.0
    %284 = vmatpush1.msra.mxu0 0.0
    %285 = vmatprep.subr.mxu0 0.0
    %286 = vmatpush1.msra.mxu0 0.0
    %287 = vmatprep.subr.mxu0 0.0
    %288 = vmatpush1.msra.mxu0 0.0
    %289 = vmatprep.subr.mxu0 0.0
    %290 = vmatpush1.msra.mxu0 0.0
    %291 = vmatprep.mubr.f32.mxu0 0.0
    %292 = vmatmul.mubr.f32.gmra.mrb[0].mxu0 %v225
    %v293 = vpop.f32.mrb[0].mxu0
    %v294 = vadd.f32 %v222, %v293
    %v295 = vpop.f32.mrb[0].mxu0
    %296 = vdwg.mxu0
    %vm297 = vcmask 64512
    %v298 = vsel %vm297, %v294, 0.0
    %299 = vadd.xlane.f32.xlu0 %v298
    %v300 = vpop.xlane.xlu0 %299
    %v301 = vrcp.pop 8.0
    %v302 = vmul.f32 %v300, %v301
    %304 = vset.pattern.permute.xlu0 8
    %305 = vperm.xlu0 %304, %v294
    %v306 = vpop.permute.xlu0 %305
    %v308 = vadd.f32 %v306, %v294
    %v309 = vsub.f32 %v308, %v302
    %310 = vst.msk [vmem:[#allocation5] sm:$0xff] %vm297, %v309
    // Predicated region
    $region34: #{tpu_custom_call.1} parent=1 // pred_check
      _
    $region35: #{tpu_custom_call.1} parent=1 // pred_check_branch
      %312 = sbr.rel (0) target = $region37
    $region36: #{tpu_custom_call.1} parent=1 // pred_region
      %s314 = ssub.s32 128, 128
      %315 = vsyncadd [#allocation4], %s314
      %s317 = sshll.u32 [#allocation5], 4
      %s318 = int_to_ptr.vmem [resolvable:$true] %s317
      %320 = dma.vmem_to_hbm [thread:$0]  %s318, 128, %s7, [#allocation4]
    $region37: #{tpu_custom_call.1} parent=1 // pred_fallthru
      _
    // Predicated region
    $region38: #{tpu_custom_call.1} parent=1 // pred_check
      _
    $region39: #{tpu_custom_call.1} parent=1 // pred_check_branch
      %322 = sbr.rel (0) target = $region41
    $region40: #{tpu_custom_call.1} parent=1 // pred_region
      %323 = dma.done [#allocation4], 128
    $region41: #{tpu_custom_call.1} parent=1 // pred_fallthru
      _
    %324 = vsyncpa [#allocation3], 1
    %325 = vsyncpa [#allocation4], 1

</llo_original>
